<compile_context>
chip_gen: v7x
topology: tpu7x:2x2x1
jax: 0.10.0
libtpu: 0.0.40
codegen_flags: <defaults>
</compile_context>

<pallas_src>
import jax
import jax.numpy as jnp
from jax.experimental import pallas as pl
from jax.experimental.pallas import tpu as pltpu

LANES = 128           # vreg lane width
BLOCK_ROWS = 4096     # (4096, 128) f32 block = 2 MiB per buffer


def mlp_kernel(params_ref, x_ref, o_ref):
    """Elementwise MLP over a lane-dense (tr, 128) block.

    params_ref (SMEM, f32[16]) layout:
      [0:5)   w1[j, 0]   (fc1 weight, in_features = 1)
      [5:10)  b1[j]      (fc1 bias)
      [10:15) w2[0, j]   (fc2 weight)
      [15]    b2[0]      (fc2 bias)
    y = b2 + sum_j w2[j] * relu(w1[j] * x + b1[j])
    """
    x = x_ref[...]                                            # (tr, 128) f32
    # hidden unit 0, with b2 folded into the accumulator init
    h = jnp.maximum(x * params_ref[0] + params_ref[5], 0.0)
    acc = h * params_ref[10] + params_ref[15]
    for j in range(1, 5):                                     # unrolled, VPU only
        h = jnp.maximum(x * params_ref[j] + params_ref[5 + j], 0.0)
        acc = acc + h * params_ref[10 + j]
    o_ref[...] = acc.astype(o_ref.dtype)


def _dimension_semantics():
    """CORE_PARALLEL on 2-TensorCore chips (v7x); plain 'parallel' elsewhere."""
    try:
        kind = jax.devices()[0].device_kind.lower()
    except Exception:
        kind = ""
    if ("v7" in kind or "7x" in kind) and hasattr(pltpu, "CORE_PARALLEL"):
        return (pltpu.CORE_PARALLEL,)
    return ("parallel",)


def net_forward(x, w1, b1, w2, b2, *, block_rows=BLOCK_ROWS):
    """Pallas equivalent of Net.forward.  x: (N, 1) f32 -> (N, 1) f32."""
    N = x.shape[0]

    # ---- lane-dense layout: (N, 1) -> (rows, 128), minimal (or no) padding ----
    flat = x.reshape(-1).astype(jnp.float32)          # free reshape of (N, 1)
    rows = pl.cdiv(N, LANES)
    pad = rows * LANES - N
    if pad:                                           # only when N % 128 != 0
        flat = jnp.pad(flat, (0, pad))
    x_slab = flat.reshape(rows, LANES)

    # ---- 16 parameters packed into one SMEM scalar vector ----
    params = jnp.concatenate(
        [w1.reshape(-1), b1.reshape(-1), w2.reshape(-1), b2.reshape(-1)]
    ).astype(jnp.float32)                             # (16,)

    tr = min(block_rows, rows)                        # block == full array if small
    grid = (pl.cdiv(rows, tr),)                       # ragged last block is masked

    def _call(dim_sem):
        return pl.pallas_call(
            mlp_kernel,
            out_shape=jax.ShapeDtypeStruct((rows, LANES), jnp.float32),
            grid_spec=pltpu.PrefetchScalarGridSpec(
                num_scalar_prefetch=1,                # params -> SMEM, once
                grid=grid,
                in_specs=[pl.BlockSpec((tr, LANES), lambda i, p: (i, 0))],
                out_specs=pl.BlockSpec((tr, LANES), lambda i, p: (i, 0)),
            ),
            compiler_params=pltpu.CompilerParams(
                dimension_semantics=dim_sem,
                vmem_limit_bytes=32 * 1024 * 1024,
            ),
            cost_estimate=pl.CostEstimate(
                flops=25 * rows * LANES,              # real VALU ops/elem (no f32 FMA)
                transcendentals=0,
                bytes_accessed=8 * rows * LANES,      # read + write f32
            ),
        )(params, x_slab)

    dim_sem = _dimension_semantics()
    try:
        out_slab = _call(dim_sem)
        out_slab.block_until_ready()
    except Exception:
        if dim_sem == ("parallel",):
            raise
        out_slab = _call(("parallel",))               # safe fallback semantics

    out_flat = out_slab.reshape(-1)
    if pad:
        out_flat = out_flat[:N]
    return out_flat.reshape(N, 1)


def net_forward_ref(x, w1, b1, w2, b2):
    h = jnp.maximum(x @ w1.T + b1, 0.0)
    return h @ w2.T + b2


if __name__ == "__main__":
    key = jax.random.PRNGKey(0)
    kx, k1, k2, k3, k4, kx2, kx3 = jax.random.split(key, 7)

    # Deterministic parameter init (shapes match nn.Linear(1,5) / nn.Linear(5,1)).
    w1 = jax.random.normal(k1, (5, 1), dtype=jnp.float32) * 0.5
    b1 = jax.random.normal(k2, (5,), dtype=jnp.float32) * 0.1
    w2 = jax.random.normal(k3, (1, 5), dtype=jnp.float32) * 0.5
    b2 = jax.random.normal(k4, (1,), dtype=jnp.float32) * 0.1

    # Primary small test (matches the PyTorch module's (batch, 1) input).
    N = 8
    x = jax.random.normal(kx, (N, 1), dtype=jnp.float32)
    out = net_forward(x, w1, b1, w2, b2)
    jax.block_until_ready(out)
    ref = net_forward_ref(x, w1, b1, w2, b2)
    assert out.shape == (N, 1)
    assert jnp.allclose(out, ref, atol=1e-5, rtol=1e-5)

    # Pad path: N not a multiple of 128, single (full-array) block.
    N2 = 70001
    x2 = jax.random.normal(kx2, (N2, 1), dtype=jnp.float32)
    out2 = net_forward(x2, w1, b1, w2, b2)
    jax.block_until_ready(out2)
    ref2 = net_forward_ref(x2, w1, b1, w2, b2)
    assert out2.shape == (N2, 1)
    assert jnp.allclose(out2, ref2, atol=1e-5, rtol=1e-5)

    # No-pad, multi-block path with a ragged last block (rows=4688, tr=4096).
    N3 = 4688 * 128
    x3 = jax.random.normal(kx3, (N3, 1), dtype=jnp.float32)
    out3 = net_forward(x3, w1, b1, w2, b2)
    jax.block_until_ready(out3)
    ref3 = net_forward_ref(x3, w1, b1, w2, b2)
    assert out3.shape == (N3, 1)
    assert jnp.allclose(out3, ref3, atol=1e-5, rtol=1e-5)

    print("KERNEL_OK")
</pallas_src>

<mosaic_0001>
module attributes {stable_mosaic.version = 11 : i64} {
  func.func @mlp_kernel(%arg0: i32, %arg1: memref<16xf32, #tpu.memory_space<smem>>, %arg2: memref<1x128xf32, #tpu.memory_space<vmem>>, %arg3: memref<1x128xf32, #tpu.memory_space<vmem>>) attributes {dimension_semantics = [#tpu.dimension_semantics<parallel>], iteration_bounds = array<i64: 1>, scalar_prefetch = 1 : i64, scratch_operands = 0 : i64, tpu.core_type = #tpu.core_type<tc>, window_params = [{transform_indices = @transform_0, window_bounds = array<i64: 1, 128>}, {transform_indices = @transform_1, window_bounds = array<i64: 1, 128>}]} {
    %c0 = arith.constant 0 : index
    %c0_0 = arith.constant 0 : index
    %0 = vector.load %arg2[%c0, %c0_0] : memref<1x128xf32, #tpu.memory_space<vmem>>, vector<1x128xf32>
    %c0_1 = arith.constant 0 : index
    %1 = memref.load %arg1[%c0_1] : memref<16xf32, #tpu.memory_space<smem>>
    %2 = vector.broadcast %1 : f32 to vector<1x128xf32>
    %3 = arith.mulf %0, %2 : vector<1x128xf32>
    %c5 = arith.constant 5 : index
    %4 = memref.load %arg1[%c5] : memref<16xf32, #tpu.memory_space<smem>>
    %5 = vector.broadcast %4 : f32 to vector<1x128xf32>
    %6 = arith.addf %3, %5 : vector<1x128xf32>
    %cst = arith.constant 0.000000e+00 : f32
    %7 = vector.broadcast %cst : f32 to vector<1x128xf32>
    %8 = arith.maximumf %6, %7 : vector<1x128xf32>
    %c10 = arith.constant 10 : index
    %9 = memref.load %arg1[%c10] : memref<16xf32, #tpu.memory_space<smem>>
    %10 = vector.broadcast %9 : f32 to vector<1x128xf32>
    %11 = arith.mulf %8, %10 : vector<1x128xf32>
    %c15 = arith.constant 15 : index
    %12 = memref.load %arg1[%c15] : memref<16xf32, #tpu.memory_space<smem>>
    %13 = vector.broadcast %12 : f32 to vector<1x128xf32>
    %14 = arith.addf %11, %13 : vector<1x128xf32>
    %c1 = arith.constant 1 : index
    %15 = memref.load %arg1[%c1] : memref<16xf32, #tpu.memory_space<smem>>
    %16 = vector.broadcast %15 : f32 to vector<1x128xf32>
    %17 = arith.mulf %0, %16 : vector<1x128xf32>
    %c6 = arith.constant 6 : index
    %18 = memref.load %arg1[%c6] : memref<16xf32, #tpu.memory_space<smem>>
    %19 = vector.broadcast %18 : f32 to vector<1x128xf32>
    %20 = arith.addf %17, %19 : vector<1x128xf32>
    %cst_2 = arith.constant 0.000000e+00 : f32
    %21 = vector.broadcast %cst_2 : f32 to vector<1x128xf32>
    %22 = arith.maximumf %20, %21 : vector<1x128xf32>
    %c11 = arith.constant 11 : index
    %23 = memref.load %arg1[%c11] : memref<16xf32, #tpu.memory_space<smem>>
    %24 = vector.broadcast %23 : f32 to vector<1x128xf32>
    %25 = arith.mulf %22, %24 : vector<1x128xf32>
    %26 = arith.addf %14, %25 : vector<1x128xf32>
    %c2 = arith.constant 2 : index
    %27 = memref.load %arg1[%c2] : memref<16xf32, #tpu.memory_space<smem>>
    %28 = vector.broadcast %27 : f32 to vector<1x128xf32>
    %29 = arith.mulf %0, %28 : vector<1x128xf32>
    %c7 = arith.constant 7 : index
    %30 = memref.load %arg1[%c7] : memref<16xf32, #tpu.memory_space<smem>>
    %31 = vector.broadcast %30 : f32 to vector<1x128xf32>
    %32 = arith.addf %29, %31 : vector<1x128xf32>
    %cst_3 = arith.constant 0.000000e+00 : f32
    %33 = vector.broadcast %cst_3 : f32 to vector<1x128xf32>
    %34 = arith.maximumf %32, %33 : vector<1x128xf32>
    %c12 = arith.constant 12 : index
    %35 = memref.load %arg1[%c12] : memref<16xf32, #tpu.memory_space<smem>>
    %36 = vector.broadcast %35 : f32 to vector<1x128xf32>
    %37 = arith.mulf %34, %36 : vector<1x128xf32>
    %38 = arith.addf %26, %37 : vector<1x128xf32>
    %c3 = arith.constant 3 : index
    %39 = memref.load %arg1[%c3] : memref<16xf32, #tpu.memory_space<smem>>
    %40 = vector.broadcast %39 : f32 to vector<1x128xf32>
    %41 = arith.mulf %0, %40 : vector<1x128xf32>
    %c8 = arith.constant 8 : index
    %42 = memref.load %arg1[%c8] : memref<16xf32, #tpu.memory_space<smem>>
    %43 = vector.broadcast %42 : f32 to vector<1x128xf32>
    %44 = arith.addf %41, %43 : vector<1x128xf32>
    %cst_4 = arith.constant 0.000000e+00 : f32
    %45 = vector.broadcast %cst_4 : f32 to vector<1x128xf32>
    %46 = arith.maximumf %44, %45 : vector<1x128xf32>
    %c13 = arith.constant 13 : index
    %47 = memref.load %arg1[%c13] : memref<16xf32, #tpu.memory_space<smem>>
    %48 = vector.broadcast %47 : f32 to vector<1x128xf32>
    %49 = arith.mulf %46, %48 : vector<1x128xf32>
    %50 = arith.addf %38, %49 : vector<1x128xf32>
    %c4 = arith.constant 4 : index
    %51 = memref.load %arg1[%c4] : memref<16xf32, #tpu.memory_space<smem>>
    %52 = vector.broadcast %51 : f32 to vector<1x128xf32>
    %53 = arith.mulf %0, %52 : vector<1x128xf32>
    %c9 = arith.constant 9 : index
    %54 = memref.load %arg1[%c9] : memref<16xf32, #tpu.memory_space<smem>>
    %55 = vector.broadcast %54 : f32 to vector<1x128xf32>
    %56 = arith.addf %53, %55 : vector<1x128xf32>
    %cst_5 = arith.constant 0.000000e+00 : f32
    %57 = vector.broadcast %cst_5 : f32 to vector<1x128xf32>
    %58 = arith.maximumf %56, %57 : vector<1x128xf32>
    %c14 = arith.constant 14 : index
    %59 = memref.load %arg1[%c14] : memref<16xf32, #tpu.memory_space<smem>>
    %60 = vector.broadcast %59 : f32 to vector<1x128xf32>
    %61 = arith.mulf %58, %60 : vector<1x128xf32>
    %62 = arith.addf %50, %61 : vector<1x128xf32>
    %c0_6 = arith.constant 0 : index
    %c0_7 = arith.constant 0 : index
    %63 = vector.load %arg3[%c0_6, %c0_7] : memref<1x128xf32, #tpu.memory_space<vmem>>, vector<1x128xf32>
    tpu.vector_store %arg3[%c0_6, %c0_7], %62 {strides = array<i32>} : memref<1x128xf32, #tpu.memory_space<vmem>>, vector<1x128xf32>,
    return
  }
  func.func @transform_0(%arg0: i32, %arg1: memref<16xf32, #tpu.memory_space<smem>>) -> (i32, i32) {
    %c0_i32 = arith.constant 0 : i32
    %c0_i32_0 = arith.constant 0 : i32
    return %arg0, %c0_i32 : i32, i32
  }
  func.func @transform_1(%arg0: i32, %arg1: memref<16xf32, #tpu.memory_space<smem>>) -> (i32, i32) {
    %c0_i32 = arith.constant 0 : i32
    %c0_i32_0 = arith.constant 0 : i32
    return %arg0, %c0_i32 : i32, i32
  }
}

</mosaic_0001>

<llo_original>
// kernel: tpu_custom_call.1
$region0: #{tpu_custom_call.1}
  #allocation0 [shape = 'u32[]', space=smem, size = 0x4, offset = 0x4, fixed_abs, tag = 'smem constant byte address 0x4 - core index']
  #allocation1 [shape = 'u32[144,128]{1,0:T(1,128)}', space=vmem, size = 0x12000, scoped, tag = 'internal scratch']
  #allocation2 [shape = 's32[1]{0}', space=sflag, size = 0x4, scoped, tag = 'scoped memory for tpu_custom_call.1']
  #allocation3 [shape = 'u8[512]{0}', space=smem, size = 0x200, scoped, tag = 'prefetched SMEM operand 0']
  %s0 = inlined_call_operand.hbm [shape: f32[16], index: 0, kind: input, shape index: {}]
  %s1 = inlined_call_operand.vmem [shape: f32[1,128], index: 1, kind: input, shape index: {}]
  %s2 = inlined_call_operand.hbm [shape: f32[1,128], index: 2, kind: output, shape index: {}]
  %s3 = sld [smem:[#allocation0]]
  $region14: #{tpu_custom_call.1} parent=0
    _
  %s5 = ssub.s32 1, %s3
  %s6 = scalar_select 0, %s5, %s3
  %8 = dma.hbm_to_smem %s0, 16, [#allocation3], [#allocation2]
  %9 = dma.done [#allocation2], 16
  %10 = sfence
  $region1: #{tpu_custom_call.1} parent=0
    #allocation4 [shape = 'u8[512]{0}', space=vmem, size = 0x400, scoped, tag = 'output window, operand 0, single buffered']
    #allocation5 [shape = 's32[1]{0}', space=sflag, size = 0x4, scoped, tag = 'scoped memory for tpu_custom_call.1']
    %11 = vsyncpa [#allocation5], 0
    // Predicated region
    $region2: #{tpu_custom_call.1} parent=1 // pred_check
      _
    $region3: #{tpu_custom_call.1} parent=1 // pred_check_branch
      %13 = sbr.rel (0) target = $region5
    $region4: #{tpu_custom_call.1} parent=1 // pred_region
      _
    $region5: #{tpu_custom_call.1} parent=1 // pred_fallthru
      _
    %v14 = vld [vmem:[%s1] sm:$0x1]
    %s15 = sld [smem:[#allocation3]]
    %v16 = vstv %s15
    %v17 = vmul.f32 %v14, %v16
    %s18 = sld [smem:[#allocation3 + $0x5]]
    %v19 = vstv %s18
    %v20 = vadd.f32 %v17, %v19
    %v21 = vmax.f32 %v20, 0.0
    %s22 = sld [smem:[#allocation3 + $0xa]]
    %v23 = vstv %s22
    %v24 = vmul.f32 %v21, %v23
    %s25 = sld [smem:[#allocation3 + $0xf]]
    %v26 = vstv %s25
    %v27 = vadd.f32 %v24, %v26
    %s28 = sld [smem:[#allocation3 + $0x1]]
    %v29 = vstv %s28
    %v30 = vmul.f32 %v14, %v29
    %s31 = sld [smem:[#allocation3 + $0x6]]
    %v32 = vstv %s31
    %v33 = vadd.f32 %v30, %v32
    %v34 = vmax.f32 %v33, 0.0
    %s35 = sld [smem:[#allocation3 + $0xb]]
    %v36 = vstv %s35
    %v37 = vmul.f32 %v34, %v36
    %v38 = vadd.f32 %v27, %v37
    %s39 = sld [smem:[#allocation3 + $0x2]]
    %v40 = vstv %s39
    %v41 = vmul.f32 %v14, %v40
    %s42 = sld [smem:[#allocation3 + $0x7]]
    %v43 = vstv %s42
    %v44 = vadd.f32 %v41, %v43
    %v45 = vmax.f32 %v44, 0.0
    %s46 = sld [smem:[#allocation3 + $0xc]]
    %v47 = vstv %s46
    %v48 = vmul.f32 %v45, %v47
    %v49 = vadd.f32 %v38, %v48
    %s50 = sld [smem:[#allocation3 + $0x3]]
    %v51 = vstv %s50
    %v52 = vmul.f32 %v14, %v51
    %s53 = sld [smem:[#allocation3 + $0x8]]
    %v54 = vstv %s53
    %v55 = vadd.f32 %v52, %v54
    %v56 = vmax.f32 %v55, 0.0
    %s57 = sld [smem:[#allocation3 + $0xd]]
    %v58 = vstv %s57
    %v59 = vmul.f32 %v56, %v58
    %v60 = vadd.f32 %v49, %v59
    %s61 = sld [smem:[#allocation3 + $0x4]]
    %v62 = vstv %s61
    %v63 = vmul.f32 %v14, %v62
    %s64 = sld [smem:[#allocation3 + $0x9]]
    %v65 = vstv %s64
    %v66 = vadd.f32 %v63, %v65
    %v67 = vmax.f32 %v66, 0.0
    %s68 = sld [smem:[#allocation3 + $0xe]]
    %v69 = vstv %s68
    %v70 = vmul.f32 %v67, %v69
    %v71 = vadd.f32 %v60, %v70
    %72 = vst [vmem:[#allocation4] sm:$0x1] %v71
    // Predicated region
    $region6: #{tpu_custom_call.1} parent=1 // pred_check
      _
    $region7: #{tpu_custom_call.1} parent=1 // pred_check_branch
      %74 = sbr.rel (0) target = $region9
    $region8: #{tpu_custom_call.1} parent=1 // pred_region
      %s76 = ssub.s32 16, 16
      %77 = vsyncadd [#allocation5], %s76
      %s79 = sshll.u32 [#allocation4], 4
      %s80 = int_to_ptr.vmem [resolvable:$true] %s79
      %82 = dma.vmem_to_hbm [thread:$0]  %s80, 16, %s2, [#allocation5]
    $region9: #{tpu_custom_call.1} parent=1 // pred_fallthru
      _
    // Predicated region
    $region10: #{tpu_custom_call.1} parent=1 // pred_check
      _
    $region11: #{tpu_custom_call.1} parent=1 // pred_check_branch
      %84 = sbr.rel (0) target = $region13
    $region12: #{tpu_custom_call.1} parent=1 // pred_region
      %85 = dma.done [#allocation5], 16
    $region13: #{tpu_custom_call.1} parent=1 // pred_fallthru
      _
    %86 = vsyncpa [#allocation5], 1

</llo_original>
